<compile_context>
chip_gen: v5e
topology: v5e:2x2
jax: 0.10.0
libtpu: 0.0.40
codegen_flags: <defaults>
</compile_context>

<pallas_src>
import jax
import jax.numpy as jnp
from jax.experimental import pallas as pl
from jax.experimental.pallas import tpu as pltpu

HIDDEN = 30          # fixed by the module definition (nn.Linear(input_size, 30))
LANE = 128           # TPU lane width


def _round_up(x, m):
    return (x + m - 1) // m * m


def _mlp_kernel(x_ref, w1_ref, b1_ref, w2_ref, b2_ref, o_ref):
    # x:  (TB, D_in)         w1: (D_in, H_pad)    b1: (1, H_pad)  [f32]
    # w2: (H_pad, A)         b2: (1, A)           [f32]
    # o:  (TB, A)
    h = jnp.dot(x_ref[...], w1_ref[...],
                preferred_element_type=jnp.float32) + b1_ref[...]
    h = jnp.maximum(h, 0.0)                                   # ReLU in f32
    q = jnp.dot(h.astype(w2_ref.dtype), w2_ref[...],
                preferred_element_type=jnp.float32) + b2_ref[...]
    o_ref[...] = q.astype(o_ref.dtype)


def network_forward(state, w1, b1, w2, b2, *, block_b=1024, out_dtype=None,
                    min_pallas_batch=128):
    """Q-values = fc2(relu(fc1(state))).

    state: (B, input_size), f32 or bf16 (compute dtype follows state.dtype;
           supply bf16 state to halve the dominant HBM read stream)
    w1:    (input_size, 30)   b1: (30,)
    w2:    (30, nb_action)    b2: (nb_action,)
    returns (B, nb_action) in `out_dtype` (default: state.dtype)
    """
    B, d_in = state.shape
    hidden = w1.shape[1]
    nb_action = w2.shape[1]
    out_dtype = state.dtype if out_dtype is None else out_dtype
    compute_dtype = state.dtype

    # --- tiny-batch fast path: Pallas launch + padding would dominate --------
    if B < min_pallas_batch:
        h = jnp.maximum(state @ w1.astype(compute_dtype) + b1, 0.0)
        return (h @ w2.astype(compute_dtype) + b2).astype(out_dtype)

    # --- pad hidden dim to a lane multiple (30 -> 128): full-vreg VPU work ---
    h_pad = _round_up(hidden, LANE)
    w1_p = w1.astype(compute_dtype)
    w2_p = w2.astype(compute_dtype)
    b1_p = b1.reshape(1, hidden).astype(jnp.float32)
    b2_p = b2.reshape(1, nb_action).astype(jnp.float32)
    if h_pad != hidden:
        w1_p = jnp.zeros((d_in, h_pad), compute_dtype).at[:, :hidden].set(w1_p)
        b1_p = jnp.zeros((1, h_pad), jnp.float32).at[:, :hidden].set(b1_p)
        w2_p = jnp.zeros((h_pad, nb_action), compute_dtype).at[:hidden, :].set(w2_p)

    # --- batch tiling: tb multiple of 8; >= 2 grid steps when B > 8 so the ---
    # --- "parallel" axis shards across both TensorCores on v7x ---------------
    if B <= 8:
        tb = 8
    else:
        tb = min(block_b, _round_up(pl.cdiv(B, 2), 8))
    b_pad = _round_up(B, tb)
    if b_pad != B:
        # tiny pad copy (d_in is small); only the ragged tail rows are junk
        state_p = jnp.zeros((b_pad, d_in), state.dtype).at[:B, :].set(state)
    else:
        state_p = state

    grid = (b_pad // tb,)
    out = pl.pallas_call(
        _mlp_kernel,
        out_shape=jax.ShapeDtypeStruct((b_pad, nb_action), out_dtype),
        grid_spec=pltpu.PrefetchScalarGridSpec(
            num_scalar_prefetch=0,
            grid=grid,
            in_specs=[
                pl.BlockSpec((tb, d_in), lambda i: (i, 0)),          # state tile
                pl.BlockSpec((d_in, h_pad), lambda i: (0, 0)),       # w1 (resident)
                pl.BlockSpec((1, h_pad), lambda i: (0, 0)),          # b1 (resident)
                pl.BlockSpec((h_pad, nb_action), lambda i: (0, 0)),  # w2 (resident)
                pl.BlockSpec((1, nb_action), lambda i: (0, 0)),      # b2 (resident)
            ],
            # true-width output block: last dim equals full array dim -> legal
            out_specs=pl.BlockSpec((tb, nb_action), lambda i: (i, 0)),
        ),
        compiler_params=pltpu.CompilerParams(
            dimension_semantics=("parallel",),   # shard batch tiles across TCs (v7x)
        ),
    )(state_p, w1_p, b1_p, w2_p, b2_p)

    return out if b_pad == B else out[:B]


def init_params(key, input_size, nb_action):
    """Deterministic init matching PyTorch nn.Linear default:
    U(-1/sqrt(fan_in), 1/sqrt(fan_in)) for both weight and bias."""
    k1, k2, k3, k4 = jax.random.split(key, 4)
    bound1 = 1.0 / jnp.sqrt(float(input_size))
    bound2 = 1.0 / jnp.sqrt(float(HIDDEN))
    w1 = jax.random.uniform(k1, (input_size, HIDDEN), jnp.float32, -bound1, bound1)
    b1 = jax.random.uniform(k2, (HIDDEN,), jnp.float32, -bound1, bound1)
    w2 = jax.random.uniform(k3, (HIDDEN, nb_action), jnp.float32, -bound2, bound2)
    b2 = jax.random.uniform(k4, (nb_action,), jnp.float32, -bound2, bound2)
    return w1, b1, w2, b2


def _ref_forward(state, w1, b1, w2, b2):
    return jnp.maximum(state @ w1 + b1, 0.0) @ w2 + b2


if __name__ == "__main__":
    key = jax.random.PRNGKey(0)
    kp, kx1, kx2 = jax.random.split(key, 3)

    input_size = 8   # "state" dimension
    nb_action = 4
    w1, b1, w2, b2 = init_params(kp, input_size, nb_action)

    # --- small case: force the Pallas path to exercise padding + single tile --
    batch = 2
    state = jax.random.normal(kx1, (batch, input_size), jnp.float32)
    ref = _ref_forward(state, w1, b1, w2, b2)
    q_values = jax.block_until_ready(
        network_forward(state, w1, b1, w2, b2, min_pallas_batch=0))
    assert q_values.shape == (batch, nb_action)
    assert jnp.allclose(q_values, ref, atol=1e-5, rtol=1e-5)

    # --- default tiny-batch fast path (skips Pallas; plain jnp GEMV) ---------
    q_fast = jax.block_until_ready(network_forward(state, w1, b1, w2, b2))
    assert jnp.allclose(q_fast, ref, atol=1e-5, rtol=1e-5)

    # --- batched case exercising the grid, ragged batch, and >=2 grid steps --
    big_batch = 300   # not a multiple of 8 or of the batch tile on purpose
    state_big = jax.random.normal(kx2, (big_batch, input_size), jnp.float32)
    q_big = jax.block_until_ready(
        network_forward(state_big, w1, b1, w2, b2))
    ref_big = _ref_forward(state_big, w1, b1, w2, b2)
    assert q_big.shape == (big_batch, nb_action)
    assert jnp.allclose(q_big, ref_big, atol=1e-5, rtol=1e-5)

    print("KERNEL_OK")
</pallas_src>

<mosaic_0001>
module attributes {stable_mosaic.version = 11 : i64} {
  func.func @_mlp_kernel(%arg0: i32, %arg1: memref<8x8xf32, #tpu.memory_space<vmem>>, %arg2: memref<8x128xf32, #tpu.memory_space<vmem>>, %arg3: memref<1x128xf32, #tpu.memory_space<vmem>>, %arg4: memref<128x4xf32, #tpu.memory_space<vmem>>, %arg5: memref<1x4xf32, #tpu.memory_space<vmem>>, %arg6: memref<8x4xf32, #tpu.memory_space<vmem>>) attributes {dimension_semantics = [#tpu.dimension_semantics<parallel>], iteration_bounds = array<i64: 1>, scalar_prefetch = 0 : i64, scratch_operands = 0 : i64, tpu.core_type = #tpu.core_type<tc>, window_params = [{transform_indices = @transform_0, window_bounds = array<i64: 8, 8>}, {pipeline_mode = #tpu.pipeline_mode<synchronous>, transform_indices = @transform_1, window_bounds = array<i64: 8, 128>}, {pipeline_mode = #tpu.pipeline_mode<synchronous>, transform_indices = @transform_2, window_bounds = array<i64: 1, 128>}, {pipeline_mode = #tpu.pipeline_mode<synchronous>, transform_indices = @transform_3, window_bounds = array<i64: 128, 4>}, {pipeline_mode = #tpu.pipeline_mode<synchronous>, transform_indices = @transform_4, window_bounds = array<i64: 1, 4>}, {transform_indices = @transform_5, window_bounds = array<i64: 8, 4>}]} {
    %c0 = arith.constant 0 : index
    %c0_0 = arith.constant 0 : index
    %0 = vector.load %arg1[%c0, %c0_0] : memref<8x8xf32, #tpu.memory_space<vmem>>, vector<8x8xf32>
    %c0_1 = arith.constant 0 : index
    %c0_2 = arith.constant 0 : index
    %1 = vector.load %arg2[%c0_1, %c0_2] : memref<8x128xf32, #tpu.memory_space<vmem>>, vector<8x128xf32>
    %cst = arith.constant dense<0.000000e+00> : vector<8x128xf32>
    %2 = tpu.matmul %0, %1, %cst {dimension_numbers = #tpu.dot_dimension_numbers<[1], [0], [0], [1], [0, 0, 1, 1], [], []>} : vector<8x8xf32>, vector<8x128xf32>, vector<8x128xf32> -> vector<8x128xf32>
    %c0_3 = arith.constant 0 : index
    %c0_4 = arith.constant 0 : index
    %3 = vector.load %arg3[%c0_3, %c0_4] : memref<1x128xf32, #tpu.memory_space<vmem>>, vector<1x128xf32>
    %4 = vector.broadcast %3 : vector<1x128xf32> to vector<8x128xf32>
    %5 = arith.addf %2, %4 : vector<8x128xf32>
    %cst_5 = arith.constant 0.000000e+00 : f32
    %6 = vector.broadcast %cst_5 : f32 to vector<8x128xf32>
    %7 = arith.maximumf %5, %6 : vector<8x128xf32>
    %c0_6 = arith.constant 0 : index
    %c0_7 = arith.constant 0 : index
    %8 = vector.load %arg4[%c0_6, %c0_7] : memref<128x4xf32, #tpu.memory_space<vmem>>, vector<128x4xf32>
    %cst_8 = arith.constant dense<0.000000e+00> : vector<8x4xf32>
    %9 = tpu.matmul %7, %8, %cst_8 {dimension_numbers = #tpu.dot_dimension_numbers<[1], [0], [0], [1], [0, 0, 1, 1], [], []>} : vector<8x128xf32>, vector<128x4xf32>, vector<8x4xf32> -> vector<8x4xf32>
    %c0_9 = arith.constant 0 : index
    %c0_10 = arith.constant 0 : index
    %10 = vector.load %arg5[%c0_9, %c0_10] : memref<1x4xf32, #tpu.memory_space<vmem>>, vector<1x4xf32>
    %11 = vector.broadcast %10 : vector<1x4xf32> to vector<8x4xf32>
    %12 = arith.addf %9, %11 : vector<8x4xf32>
    %c0_11 = arith.constant 0 : index
    %c0_12 = arith.constant 0 : index
    %13 = vector.load %arg6[%c0_11, %c0_12] : memref<8x4xf32, #tpu.memory_space<vmem>>, vector<8x4xf32>
    tpu.vector_store %arg6[%c0_11, %c0_12], %12 {strides = array<i32>} : memref<8x4xf32, #tpu.memory_space<vmem>>, vector<8x4xf32>,
    return
  }
  func.func @transform_0(%arg0: i32) -> (i32, i32) {
    %c0_i32 = arith.constant 0 : i32
    %c0_i32_0 = arith.constant 0 : i32
    return %arg0, %c0_i32 : i32, i32
  }
  func.func @transform_1(%arg0: i32) -> (i32, i32) {
    %c0_i32 = arith.constant 0 : i32
    %c0_i32_0 = arith.constant 0 : i32
    %c0_i32_1 = arith.constant 0 : i32
    return %c0_i32, %c0_i32_0 : i32, i32
  }
  func.func @transform_2(%arg0: i32) -> (i32, i32) {
    %c0_i32 = arith.constant 0 : i32
    %c0_i32_0 = arith.constant 0 : i32
    %c0_i32_1 = arith.constant 0 : i32
    return %c0_i32, %c0_i32_0 : i32, i32
  }
  func.func @transform_3(%arg0: i32) -> (i32, i32) {
    %c0_i32 = arith.constant 0 : i32
    %c0_i32_0 = arith.constant 0 : i32
    %c0_i32_1 = arith.constant 0 : i32
    return %c0_i32, %c0_i32_0 : i32, i32
  }
  func.func @transform_4(%arg0: i32) -> (i32, i32) {
    %c0_i32 = arith.constant 0 : i32
    %c0_i32_0 = arith.constant 0 : i32
    %c0_i32_1 = arith.constant 0 : i32
    return %c0_i32, %c0_i32_0 : i32, i32
  }
  func.func @transform_5(%arg0: i32) -> (i32, i32) {
    %c0_i32 = arith.constant 0 : i32
    %c0_i32_0 = arith.constant 0 : i32
    return %arg0, %c0_i32 : i32, i32
  }
}

</mosaic_0001>

<llo_original>
// kernel: tpu_custom_call.1
$region0: #{tpu_custom_call.1}
  #allocation0 [shape = 'u32[]', space=smem, size = 0x4, offset = 0x4, fixed_abs, tag = 'smem constant byte address 0x4 - core index']
  #allocation1 [shape = 'u32[72,128]{1,0:T(1,128)}', space=vmem, size = 0x9000, scoped, tag = 'internal scratch']
  %s0 = inlined_call_operand.vmem [shape: f32[8,8], index: 0, kind: input, shape index: {}]
  %s1 = inlined_call_operand.vmem [shape: f32[8,128], index: 1, kind: input, shape index: {}]
  %s2 = inlined_call_operand.vmem [shape: f32[1,128], index: 2, kind: input, shape index: {}]
  %s3 = inlined_call_operand.vmem [shape: f32[128,4], index: 3, kind: input, shape index: {}]
  %s4 = inlined_call_operand.vmem [shape: f32[1,4], index: 4, kind: input, shape index: {}]
  %s5 = inlined_call_operand.vmem [shape: f32[8,4], index: 5, kind: output, shape index: {}]
  %s6 = sld [smem:[#allocation0]]
  $region30: #{tpu_custom_call.1} parent=0
    _
  %s8 = ssub.s32 1, %s6
  %s9 = scalar_select 0, %s8, %s6
  // Predicated region
  $region2: #{tpu_custom_call.1} parent=0 // pred_check
    _
  $region3: #{tpu_custom_call.1} parent=0 // pred_check_branch
    %11 = sbr.rel (0) target = $region5
  $region4: #{tpu_custom_call.1} parent=0 // pred_region
    _
  $region5: #{tpu_custom_call.1} parent=0 // pred_fallthru
    _
  // Predicated region
  $region6: #{tpu_custom_call.1} parent=0 // pred_check
    _
  $region7: #{tpu_custom_call.1} parent=0 // pred_check_branch
    %13 = sbr.rel (0) target = $region9
  $region8: #{tpu_custom_call.1} parent=0 // pred_region
    _
  $region9: #{tpu_custom_call.1} parent=0 // pred_fallthru
    _
  // Predicated region
  $region10: #{tpu_custom_call.1} parent=0 // pred_check
    _
  $region11: #{tpu_custom_call.1} parent=0 // pred_check_branch
    %15 = sbr.rel (0) target = $region13
  $region12: #{tpu_custom_call.1} parent=0 // pred_region
    _
  $region13: #{tpu_custom_call.1} parent=0 // pred_fallthru
    _
  // Predicated region
  $region14: #{tpu_custom_call.1} parent=0 // pred_check
    _
  $region15: #{tpu_custom_call.1} parent=0 // pred_check_branch
    %17 = sbr.rel (0) target = $region17
  $region16: #{tpu_custom_call.1} parent=0 // pred_region
    _
  $region17: #{tpu_custom_call.1} parent=0 // pred_fallthru
    _
  // Predicated region
  $region18: #{tpu_custom_call.1} parent=0 // pred_check
    _
  $region19: #{tpu_custom_call.1} parent=0 // pred_check_branch
    %19 = sbr.rel (0) target = $region21
  $region20: #{tpu_custom_call.1} parent=0 // pred_region
    _
  $region21: #{tpu_custom_call.1} parent=0 // pred_fallthru
    _
  %v20 = vld [vmem:[%s0] sm:$0xff]
  %v21 = vld [vmem:[%s1] sm:$0xff]
  %v22 = vld [vmem:[%s2] sm:$0x1]
  %v24 = vperm.slane %v22, 0
  %vm26 = vcmask 64512
  %v28 = vsel %vm26, %v20, 0
  %30 = vmatpush.msra.mxu0 0.0
  %31 = vmatpush.msra.mxu0 0.0
  %32 = vmatpush.msra.mxu0 0.0
  %33 = vmatpush.msra.mxu0 0.0
  %34 = vmatpush.msra.mxu0 0.0
  %35 = vmatpush.msra.mxu0 0.0
  %36 = vmatpush.msra.mxu0 0.0
  %37 = vmatpush.msra.mxu0 0.0
  %38 = vmatpush.msra.mxu0 0.0
  %39 = vmatpush.msra.mxu0 0.0
  %40 = vmatpush.msra.mxu0 0.0
  %41 = vmatpush.msra.mxu0 0.0
  %42 = vmatpush.msra.mxu0 0.0
  %43 = vmatpush.msra.mxu0 0.0
  %44 = vmatpush.msra.mxu0 0.0
  %45 = vmatpush.msra.mxu0 %v21
  %46 = vmatmul.f32.gmra.mxu0 %v28
  %v47 = vpop.f32.mrf.mxu0
  %v48 = vadd.f32 %v24, %v47
  %49 = vdwg.mxu0
  %v50 = vmax.f32 %v48, 0.0
  %v51 = vld [vmem:[%s3] sm:$0xff]
  %v52 = vld [vmem:[%s3 + $0x8] sm:$0xff]
  %v53 = vld [vmem:[%s3 + $0x10] sm:$0xff]
  %v54 = vld [vmem:[%s3 + $0x18] sm:$0xff]
  %v55 = vld [vmem:[%s3 + $0x20] sm:$0xff]
  %v56 = vld [vmem:[%s3 + $0x28] sm:$0xff]
  %v57 = vld [vmem:[%s3 + $0x30] sm:$0xff]
  %v58 = vld [vmem:[%s3 + $0x38] sm:$0xff]
  %v59 = vld [vmem:[%s3 + $0x40] sm:$0xff]
  %v60 = vld [vmem:[%s3 + $0x48] sm:$0xff]
  %v61 = vld [vmem:[%s3 + $0x50] sm:$0xff]
  %v62 = vld [vmem:[%s3 + $0x58] sm:$0xff]
  %v63 = vld [vmem:[%s3 + $0x60] sm:$0xff]
  %v64 = vld [vmem:[%s3 + $0x68] sm:$0xff]
  %v65 = vld [vmem:[%s3 + $0x70] sm:$0xff]
  %v66 = vld [vmem:[%s3 + $0x78] sm:$0xff]
  %v67 = vld [vmem:[%s4] sm:$0x1]
  %v69 = vperm.slane %v67, 0
  %71 = vmatpush.msra.mxu0 %v66
  %72 = vmatpush.msra.mxu0 %v65
  %73 = vmatpush.msra.mxu0 %v64
  %74 = vmatpush.msra.mxu0 %v63
  %75 = vmatpush.msra.mxu0 %v62
  %76 = vmatpush.msra.mxu0 %v61
  %77 = vmatpush.msra.mxu0 %v60
  %78 = vmatpush.msra.mxu0 %v59
  %79 = vmatpush.msra.mxu0 %v58
  %80 = vmatpush.msra.mxu0 %v57
  %81 = vmatpush.msra.mxu0 %v56
  %82 = vmatpush.msra.mxu0 %v55
  %83 = vmatpush.msra.mxu0 %v54
  %84 = vmatpush.msra.mxu0 %v53
  %85 = vmatpush.msra.mxu0 %v52
  %86 = vmatpush.msra.mxu0 %v51
  %87 = vmatmul.f32.gmra.mxu0 %v50
  %v88 = vpop.f32.mrf.mxu0
  %v89 = vadd.f32 %v69, %v88
  %90 = vdwg.mxu0
  %vm91 = vcmask 31744
  %92 = vst.msk [vmem:[%s5] sm:$0xff] %vm91, %v89
  // Predicated region
  $region22: #{tpu_custom_call.1} parent=0 // pred_check
    _
  $region23: #{tpu_custom_call.1} parent=0 // pred_check_branch
    %94 = sbr.rel (0) target = $region25
  $region24: #{tpu_custom_call.1} parent=0 // pred_region
    _
  $region25: #{tpu_custom_call.1} parent=0 // pred_fallthru
    _
  // Predicated region
  $region26: #{tpu_custom_call.1} parent=0 // pred_check
    _
  $region27: #{tpu_custom_call.1} parent=0 // pred_check_branch
    %96 = sbr.rel (0) target = $region29
  $region28: #{tpu_custom_call.1} parent=0 // pred_region
    _
  $region29: #{tpu_custom_call.1} parent=0 // pred_fallthru
    _

</llo_original>
